<compile_context>
chip_gen: v7x
topology: tpu7x:2x2x1
jax: 0.10.0
libtpu: 0.0.40
codegen_flags: <defaults>
</compile_context>

<pallas_src>
import functools

import jax
import jax.numpy as jnp
from jax import lax
from jax.experimental import pallas as pl
from jax.experimental.pallas import tpu as pltpu


def _round_up(a, b):
    return (a + b - 1) // b * b


def _edgeconv_kernel(m_src_ref, adjt_ref, t_dst_ref, o_ref, acc_ref, *, sub, neg):
    """Masked running max over one (dst-tile, src-tile) grid cell.

    m_src_ref : (Ts, F)  source message term  x_u @ (Wp - Wt)^T
    adjt_ref  : (Ts, Tv) additive mask bias, 0.0 where edge u -> v else NEG
    t_dst_ref : (Tv, F)  dst term  x_v @ Wt^T + b_t + b_p   (float32)
    o_ref     : (Tv, F)  output tile (written once, at the last src step)
    acc_ref   : (Tv, F)  VMEM running-max accumulator across the src grid axis
    """
    k = pl.program_id(1)

    @pl.when(k == 0)
    def _():
        acc_ref[...] = jnp.full(acc_ref.shape, neg, acc_ref.dtype)

    # Skip fully-masked blocks: O(Ts*Tv) check vs O(Ts*Tv*F) aggregation work.
    has_edge = jnp.max(adjt_ref[...]) >= jnp.asarray(0.0, adjt_ref.dtype)

    @pl.when(has_edge)
    def _():
        n_sub = adjt_ref.shape[0] // sub

        def body(j, acc):
            s0 = pl.multiple_of(j * sub, sub)
            bias_c = adjt_ref[pl.ds(s0, sub), :]    # (sub, Tv) sublane slice
            msg_c = m_src_ref[pl.ds(s0, sub), :]    # (sub, F)  sublane slice
            # One small XLU relayout per chunk, reused by all `sub` rows.
            bias_t = bias_c.T                       # (Tv, sub)
            # Statically unrolled running max: only the (Tv,F) acc stays live.
            for s in range(sub):
                acc = jnp.maximum(acc, bias_t[:, s:s + 1] + msg_c[s:s + 1, :])
            return acc

        acc_ref[...] = lax.fori_loop(0, n_sub, body, acc_ref[...])

    @pl.when(k == pl.num_programs(1) - 1)
    def _():
        o_ref[...] = (acc_ref[...].astype(jnp.float32)
                      + t_dst_ref[...]).astype(o_ref.dtype)


@functools.partial(
    jax.jit, static_argnames=("tile_v", "tile_s", "sub", "compute_dtype"))
def edge_conv(x, adj, w_theta, b_theta, w_phi, b_phi,
              *, tile_v=128, tile_s=1024, sub=8, compute_dtype=jnp.float32):
    """EdgeConv forward.

    x: (N, Cin) float32.  adj: (N, N), adj[v, u] != 0 iff edge u -> v.
    w_*: (Cout, Cin) PyTorch nn.Linear layout, b_*: (Cout,).
    compute_dtype: aggregation datapath dtype; use jnp.bfloat16 on v6e/v7x
    for ~2x VALU throughput (keep float32 on v5e / for exact results).
    """
    n, _ = x.shape
    cout = w_theta.shape[0]
    x = x.astype(jnp.float32)
    neg = float(jnp.finfo(compute_dtype).min)   # dtype-safe "minus infinity"

    # ---- hoisted one-shot linear algebra (plain XLA, done once) -------------
    m_src = x @ (w_phi - w_theta).T.astype(jnp.float32)              # (N, Cout)
    t_dst = x @ w_theta.T.astype(jnp.float32) + (b_theta + b_phi)    # (N, Cout)

    # ---- padding / tiling: lane-dense features, tile-aligned node axes ------
    f_p = _round_up(cout, 128)
    n_pad = _round_up(n, 128)
    tv = min(tile_v, n_pad)
    if n_pad // tv < 2 and n_pad >= 256:        # keep >=2 dst tiles (2 TCs on v7x)
        tv = _round_up(n_pad // 2, 128)
    ts = min(tile_s, n_pad)
    assert tv % 128 == 0 and ts % 128 == 0 and ts % sub == 0
    n_dst = _round_up(n, tv)
    n_src = _round_up(n, ts)

    m_src_p = jnp.zeros((n_src, f_p), compute_dtype).at[:n, :cout].set(
        m_src.astype(compute_dtype))
    t_dst_p = jnp.zeros((n_dst, f_p), jnp.float32).at[:n, :cout].set(t_dst)
    # Additive 0/NEG mask bias, src-major; transpose + select + pad fuse into
    # a single XLA pass feeding the kernel (no separate adj.T materialization).
    adjt_bias_p = jnp.full((n_src, n_dst), neg, compute_dtype).at[:n, :n].set(
        jnp.where(adj.T > 0,
                  jnp.asarray(0.0, compute_dtype),
                  jnp.asarray(neg, compute_dtype)))
    # TODO(synk): int8 / bitpacked adjacency operand (4x less N^2 DMA) for
    # very large graphs and v5e; convert to the 0/NEG bias in-kernel.
    # TODO(synk): CSR/scalar-prefetch sparse variant (O(E*F) instead of
    # O(N^2*F)) for genuinely sparse graphs.
    # TODO(synk): lane-pack 128//Cout source rows per vreg when Cout is small
    # (Cout=32 currently wastes 3/4 of every VALU op on padded lanes).

    grid = (n_dst // tv, n_src // ts)
    out_p = pl.pallas_call(
        functools.partial(_edgeconv_kernel, sub=sub, neg=neg),
        out_shape=jax.ShapeDtypeStruct((n_dst, f_p), jnp.float32),
        grid_spec=pltpu.PrefetchScalarGridSpec(
            num_scalar_prefetch=0,
            grid=grid,
            in_specs=[
                pl.BlockSpec((ts, f_p), lambda i, k: (k, 0)),   # m_src (src tile)
                pl.BlockSpec((ts, tv), lambda i, k: (k, i)),    # mask bias tile
                pl.BlockSpec((tv, f_p), lambda i, k: (i, 0)),   # t_dst (dst tile)
            ],
            out_specs=pl.BlockSpec((tv, f_p), lambda i, k: (i, 0)),
            scratch_shapes=[pltpu.VMEM((tv, f_p), compute_dtype)],
        ),
        compiler_params=pltpu.CompilerParams(
            dimension_semantics=("parallel", "arbitrary")),
    )(m_src_p, adjt_bias_p, t_dst_p)

    return out_p[:n, :cout]


def _reference(x, adj, w_theta, b_theta, w_phi, b_phi):
    """Pure-JAX edge-wise reference (message + max aggregation)."""
    theta = x @ w_theta.T + b_theta          # theta_lin(x_v) + b_t
    phi = x @ w_phi.T + b_phi                # phi(x_u)
    theta_src = x @ w_theta.T                # subtracted source part (no bias)
    e = theta[:, None, :] - theta_src[None, :, :] + phi[None, :, :]  # (N,N,F)
    e = jnp.where(adj[:, :, None] > 0, e, -jnp.inf)
    return jnp.max(e, axis=1)


if __name__ == "__main__":
    N, C_IN, C_OUT = 16, 8, 32

    key = jax.random.PRNGKey(0)
    k_x, k_wt, k_bt, k_wp, k_bp = jax.random.split(key, 5)

    x = jax.random.normal(k_x, (N, C_IN), dtype=jnp.float32)
    # nn.Linear(in_feat, out_feat): weight (out, in), bias (out,)
    w_theta = jax.random.normal(k_wt, (C_OUT, C_IN), dtype=jnp.float32) * 0.2
    b_theta = jax.random.normal(k_bt, (C_OUT,), dtype=jnp.float32) * 0.1
    w_phi = jax.random.normal(k_wp, (C_OUT, C_IN), dtype=jnp.float32) * 0.2
    b_phi = jax.random.normal(k_bp, (C_OUT,), dtype=jnp.float32) * 0.1

    # Small deterministic graph: self-loops + ring in both directions
    # (every node has in-degree >= 1, matching the module's zero-in-degree check).
    adj = jnp.zeros((N, N), dtype=jnp.float32)
    idx = jnp.arange(N)
    adj = adj.at[idx, idx].set(1.0)                    # self loops
    adj = adj.at[idx, (idx - 1) % N].set(1.0)          # edge (v-1) -> v
    adj = adj.at[idx, (idx + 1) % N].set(1.0)          # edge (v+1) -> v

    out = edge_conv(x, adj, w_theta, b_theta, w_phi, b_phi)
    out = jax.block_until_ready(out)

    ref = _reference(x, adj, w_theta, b_theta, w_phi, b_phi)
    assert out.shape == (N, C_OUT)
    assert jnp.allclose(out, ref, atol=1e-4, rtol=1e-4)

    print("KERNEL_OK")
</pallas_src>

<mosaic_0001>
module attributes {stable_mosaic.version = 11 : i64} {
  func.func @_edgeconv_kernel(%arg0: i32, %arg1: i32, %arg2: memref<128x128xf32, #tpu.memory_space<vmem>>, %arg3: memref<128x128xf32, #tpu.memory_space<vmem>>, %arg4: memref<128x128xf32, #tpu.memory_space<vmem>>, %arg5: memref<128x128xf32, #tpu.memory_space<vmem>>, %arg6: memref<128x128xf32, #tpu.memory_space<vmem>>) attributes {dimension_semantics = [#tpu.dimension_semantics<parallel>, #tpu.dimension_semantics<arbitrary>], iteration_bounds = array<i64: 1, 1>, scalar_prefetch = 0 : i64, scratch_operands = 1 : i64, tpu.core_type = #tpu.core_type<tc>, window_params = [{transform_indices = @transform_0, window_bounds = array<i64: 128, 128>}, {transform_indices = @transform_1, window_bounds = array<i64: 128, 128>}, {transform_indices = @transform_2, window_bounds = array<i64: 128, 128>}, {transform_indices = @transform_3, window_bounds = array<i64: 128, 128>}]} {
    %c0_i32 = arith.constant 0 : i32
    %0 = arith.cmpi eq, %arg1, %c0_i32 : i32
    %1 = arith.extui %0 : i1 to i32
    %c0_i32_0 = arith.constant 0 : i32
    %2 = arith.cmpi ne, %1, %c0_i32_0 : i32
    scf.if %2 {
      %cst_6 = arith.constant -3.40282347E+38 : f32
      %14 = vector.broadcast %cst_6 : f32 to vector<128x128xf32>
      %c0_7 = arith.constant 0 : index
      %c0_8 = arith.constant 0 : index
      %15 = vector.load %arg6[%c0_7, %c0_8] : memref<128x128xf32, #tpu.memory_space<vmem>>, vector<128x128xf32>
      tpu.vector_store %arg6[%c0_7, %c0_8], %14 {strides = array<i32>} : memref<128x128xf32, #tpu.memory_space<vmem>>, vector<128x128xf32>,
    } else {
    }
    %c0 = arith.constant 0 : index
    %c0_1 = arith.constant 0 : index
    %3 = vector.load %arg3[%c0, %c0_1] : memref<128x128xf32, #tpu.memory_space<vmem>>, vector<128x128xf32>
    %4 = vector.shape_cast %3 : vector<128x128xf32> to vector<1x128x128xf32>
    %cst = arith.constant dense<0xFF800000> : vector<1xf32>
    %5 = vector.multi_reduction <maximumf>, %4, %cst [1, 2] : vector<1x128x128xf32> to vector<1xf32>
    %6 = vector.shape_cast %5 : vector<1xf32> to vector<1x1x1xf32>
    %7 = vector.extract %6[0, 0, 0] : f32 from vector<1x1x1xf32>
    %cst_2 = arith.constant 0.000000e+00 : f32
    %8 = arith.cmpf oge, %7, %cst_2 : f32
    %9 = arith.extui %8 : i1 to i32
    %c0_i32_3 = arith.constant 0 : i32
    %10 = arith.cmpi ne, %9, %c0_i32_3 : i32
    scf.if %10 {
      %c0_6 = arith.constant 0 : index
      %c0_7 = arith.constant 0 : index
      %14 = vector.load %arg6[%c0_6, %c0_7] : memref<128x128xf32, #tpu.memory_space<vmem>>, vector<128x128xf32>
      %c0_i32_8 = arith.constant 0 : i32
      %c16_i32 = arith.constant 16 : i32
      %15 = arith.addi %c0_i32_8, %c16_i32 : i32
      %c1_i32 = arith.constant 1 : i32
      %16 = scf.for %arg7 = %c0_i32_8 to %15 step %c1_i32 iter_args(%arg8 = %14) -> (vector<128x128xf32>)  : i32 {
        %c8_i32 = arith.constant 8 : i32
        %18 = arith.muli %arg7, %c8_i32 : i32
        %19 = tpu.assume_multiple %18, 8 : i32
        %20 = arith.index_cast %19 : i32 to index
        %c0_12 = arith.constant 0 : index
        %21 = vector.load %arg3[%20, %c0_12] : memref<128x128xf32, #tpu.memory_space<vmem>>, vector<8x128xf32>
        %22 = arith.index_cast %19 : i32 to index
        %c0_13 = arith.constant 0 : index
        %23 = vector.load %arg2[%22, %c0_13] : memref<128x128xf32, #tpu.memory_space<vmem>>, vector<8x128xf32>
        %24 = tpu.transpose %21, [1, 0] : vector<8x128xf32> -> vector<128x8xf32>
        %25 = vector.extract_strided_slice %24 {offsets = [0, 0], sizes = [128, 1], strides = [1, 1]} : vector<128x8xf32> to vector<128x1xf32>
        %26 = vector.extract_strided_slice %23 {offsets = [0, 0], sizes = [1, 128], strides = [1, 1]} : vector<8x128xf32> to vector<1x128xf32>
        %27 = vector.broadcast %25 : vector<128x1xf32> to vector<128x128xf32>
        %28 = vector.broadcast %26 : vector<1x128xf32> to vector<128x128xf32>
        %29 = arith.addf %27, %28 : vector<128x128xf32>
        %30 = arith.maximumf %arg8, %29 : vector<128x128xf32>
        %31 = vector.extract_strided_slice %24 {offsets = [0, 1], sizes = [128, 1], strides = [1, 1]} : vector<128x8xf32> to vector<128x1xf32>
        %32 = vector.extract_strided_slice %23 {offsets = [1, 0], sizes = [1, 128], strides = [1, 1]} : vector<8x128xf32> to vector<1x128xf32>
        %33 = vector.broadcast %31 : vector<128x1xf32> to vector<128x128xf32>
        %34 = vector.broadcast %32 : vector<1x128xf32> to vector<128x128xf32>
        %35 = arith.addf %33, %34 : vector<128x128xf32>
        %36 = arith.maximumf %30, %35 : vector<128x128xf32>
        %37 = vector.extract_strided_slice %24 {offsets = [0, 2], sizes = [128, 1], strides = [1, 1]} : vector<128x8xf32> to vector<128x1xf32>
        %38 = vector.extract_strided_slice %23 {offsets = [2, 0], sizes = [1, 128], strides = [1, 1]} : vector<8x128xf32> to vector<1x128xf32>
        %39 = vector.broadcast %37 : vector<128x1xf32> to vector<128x128xf32>
        %40 = vector.broadcast %38 : vector<1x128xf32> to vector<128x128xf32>
        %41 = arith.addf %39, %40 : vector<128x128xf32>
        %42 = arith.maximumf %36, %41 : vector<128x128xf32>
        %43 = vector.extract_strided_slice %24 {offsets = [0, 3], sizes = [128, 1], strides = [1, 1]} : vector<128x8xf32> to vector<128x1xf32>
        %44 = vector.extract_strided_slice %23 {offsets = [3, 0], sizes = [1, 128], strides = [1, 1]} : vector<8x128xf32> to vector<1x128xf32>
        %45 = vector.broadcast %43 : vector<128x1xf32> to vector<128x128xf32>
        %46 = vector.broadcast %44 : vector<1x128xf32> to vector<128x128xf32>
        %47 = arith.addf %45, %46 : vector<128x128xf32>
        %48 = arith.maximumf %42, %47 : vector<128x128xf32>
        %49 = vector.extract_strided_slice %24 {offsets = [0, 4], sizes = [128, 1], strides = [1, 1]} : vector<128x8xf32> to vector<128x1xf32>
        %50 = vector.extract_strided_slice %23 {offsets = [4, 0], sizes = [1, 128], strides = [1, 1]} : vector<8x128xf32> to vector<1x128xf32>
        %51 = vector.broadcast %49 : vector<128x1xf32> to vector<128x128xf32>
        %52 = vector.broadcast %50 : vector<1x128xf32> to vector<128x128xf32>
        %53 = arith.addf %51, %52 : vector<128x128xf32>
        %54 = arith.maximumf %48, %53 : vector<128x128xf32>
        %55 = vector.extract_strided_slice %24 {offsets = [0, 5], sizes = [128, 1], strides = [1, 1]} : vector<128x8xf32> to vector<128x1xf32>
        %56 = vector.extract_strided_slice %23 {offsets = [5, 0], sizes = [1, 128], strides = [1, 1]} : vector<8x128xf32> to vector<1x128xf32>
        %57 = vector.broadcast %55 : vector<128x1xf32> to vector<128x128xf32>
        %58 = vector.broadcast %56 : vector<1x128xf32> to vector<128x128xf32>
        %59 = arith.addf %57, %58 : vector<128x128xf32>
        %60 = arith.maximumf %54, %59 : vector<128x128xf32>
        %61 = vector.extract_strided_slice %24 {offsets = [0, 6], sizes = [128, 1], strides = [1, 1]} : vector<128x8xf32> to vector<128x1xf32>
        %62 = vector.extract_strided_slice %23 {offsets = [6, 0], sizes = [1, 128], strides = [1, 1]} : vector<8x128xf32> to vector<1x128xf32>
        %63 = vector.broadcast %61 : vector<128x1xf32> to vector<128x128xf32>
        %64 = vector.broadcast %62 : vector<1x128xf32> to vector<128x128xf32>
        %65 = arith.addf %63, %64 : vector<128x128xf32>
        %66 = arith.maximumf %60, %65 : vector<128x128xf32>
        %67 = vector.extract_strided_slice %24 {offsets = [0, 7], sizes = [128, 1], strides = [1, 1]} : vector<128x8xf32> to vector<128x1xf32>
        %68 = vector.extract_strided_slice %23 {offsets = [7, 0], sizes = [1, 128], strides = [1, 1]} : vector<8x128xf32> to vector<1x128xf32>
        %69 = vector.broadcast %67 : vector<128x1xf32> to vector<128x128xf32>
        %70 = vector.broadcast %68 : vector<1x128xf32> to vector<128x128xf32>
        %71 = arith.addf %69, %70 : vector<128x128xf32>
        %72 = arith.maximumf %66, %71 : vector<128x128xf32>
        scf.yield %72 : vector<128x128xf32>
      }
      %c16_i32_9 = arith.constant 16 : i32
      %c0_10 = arith.constant 0 : index
      %c0_11 = arith.constant 0 : index
      %17 = vector.load %arg6[%c0_10, %c0_11] : memref<128x128xf32, #tpu.memory_space<vmem>>, vector<128x128xf32>
      tpu.vector_store %arg6[%c0_10, %c0_11], %16 {strides = array<i32>} : memref<128x128xf32, #tpu.memory_space<vmem>>, vector<128x128xf32>,
    } else {
    }
    %c0_i32_4 = arith.constant 0 : i32
    %11 = arith.cmpi eq, %arg1, %c0_i32_4 : i32
    %12 = arith.extui %11 : i1 to i32
    %c0_i32_5 = arith.constant 0 : i32
    %13 = arith.cmpi ne, %12, %c0_i32_5 : i32
    scf.if %13 {
      %c0_6 = arith.constant 0 : index
      %c0_7 = arith.constant 0 : index
      %14 = vector.load %arg6[%c0_6, %c0_7] : memref<128x128xf32, #tpu.memory_space<vmem>>, vector<128x128xf32>
      %c0_8 = arith.constant 0 : index
      %c0_9 = arith.constant 0 : index
      %15 = vector.load %arg4[%c0_8, %c0_9] : memref<128x128xf32, #tpu.memory_space<vmem>>, vector<128x128xf32>
      %16 = arith.addf %14, %15 : vector<128x128xf32>
      %c0_10 = arith.constant 0 : index
      %c0_11 = arith.constant 0 : index
      %17 = vector.load %arg5[%c0_10, %c0_11] : memref<128x128xf32, #tpu.memory_space<vmem>>, vector<128x128xf32>
      tpu.vector_store %arg5[%c0_10, %c0_11], %16 {strides = array<i32>} : memref<128x128xf32, #tpu.memory_space<vmem>>, vector<128x128xf32>,
    } else {
    }
    return
  }
  func.func @transform_0(%arg0: i32, %arg1: i32) -> (i32, i32) {
    %c0_i32 = arith.constant 0 : i32
    %c0_i32_0 = arith.constant 0 : i32
    return %arg1, %c0_i32 : i32, i32
  }
  func.func @transform_1(%arg0: i32, %arg1: i32) -> (i32, i32) {
    %c0_i32 = arith.constant 0 : i32
    return %arg1, %arg0 : i32, i32
  }
  func.func @transform_2(%arg0: i32, %arg1: i32) -> (i32, i32) {
    %c0_i32 = arith.constant 0 : i32
    %c0_i32_0 = arith.constant 0 : i32
    return %arg0, %c0_i32 : i32, i32
  }
  func.func @transform_3(%arg0: i32, %arg1: i32) -> (i32, i32) {
    %c0_i32 = arith.constant 0 : i32
    %c0_i32_0 = arith.constant 0 : i32
    return %arg0, %c0_i32 : i32, i32
  }
}

</mosaic_0001>

<llo_original>
// kernel: edge_conv.1
$region0: #{edge_conv.1}
  #allocation0 [shape = 'u32[]', space=smem, size = 0x4, offset = 0x4, fixed_abs, tag = 'smem constant byte address 0x4 - core index']
  #allocation1 [shape = 'u32[144,128]{1,0:T(1,128)}', space=vmem, size = 0x12000, scoped, tag = 'internal scratch']
  #allocation2 [shape = 'f32[128,128]{1,0:T(8,128)}', space=vmem, size = 0x10000, scoped, tag = 'scratch operand']
  %s0 = inlined_call_operand.vmem [shape: f32[128,128], index: 0, kind: input, shape index: {}]
  %s1 = inlined_call_operand.vmem [shape: f32[128,128], index: 1, kind: input, shape index: {}]
  %s2 = inlined_call_operand.vmem [shape: f32[128,128], index: 2, kind: input, shape index: {}]
  %s3 = inlined_call_operand.vmem [shape: f32[128,128], index: 3, kind: output, shape index: {}]
  %s4 = sld [smem:[#allocation0]]
  $region41: #{edge_conv.1} parent=0
    _
  %s6 = ssub.s32 1, %s4
  %s7 = scalar_select 0, %s6, %s4
  // Predicated region
  $region2: #{edge_conv.1} parent=0 // pred_check
    _
  $region3: #{edge_conv.1} parent=0 // pred_check_branch
    %9 = sbr.rel (0) target = $region5
  $region4: #{edge_conv.1} parent=0 // pred_region
    _
  $region5: #{edge_conv.1} parent=0 // pred_fallthru
    _
  // Predicated region
  $region6: #{edge_conv.1} parent=0 // pred_check
    _
  $region7: #{edge_conv.1} parent=0 // pred_check_branch
    %11 = sbr.rel (0) target = $region9
  $region8: #{edge_conv.1} parent=0 // pred_region
    _
  $region9: #{edge_conv.1} parent=0 // pred_fallthru
    _
  // Predicated region
  $region10: #{edge_conv.1} parent=0 // pred_check
    _
  $region11: #{edge_conv.1} parent=0 // pred_check_branch
    %13 = sbr.rel (0) target = $region13
  $region12: #{edge_conv.1} parent=0 // pred_region
    _
  $region13: #{edge_conv.1} parent=0 // pred_fallthru
    _
  %p14 = scmp.eq.s32.totalorder 0, 0
  // Predicated region
  $region14: #{edge_conv.1} parent=0 // pred_check
    %p15 = pneg %p14
  $region15: #{edge_conv.1} parent=0 // pred_check_branch
    %17 = sbr.rel (%p15) target = $region17
  $region16: #{edge_conv.1} parent=0 // pred_region
    %18 = vst [vmem:[#allocation2] sm:$0xff] -3.4028235e+38
    %19 = vst [vmem:[#allocation2 + $0x8] sm:$0xff] -3.4028235e+38
    %20 = vst [vmem:[#allocation2 + $0x10] sm:$0xff] -3.4028235e+38
    %21 = vst [vmem:[#allocation2 + $0x18] sm:$0xff] -3.4028235e+38
    %22 = vst [vmem:[#allocation2 + $0x20] sm:$0xff] -3.4028235e+38
    %23 = vst [vmem:[#allocation2 + $0x28] sm:$0xff] -3.4028235e+38
    %24 = vst [vmem:[#allocation2 + $0x30] sm:$0xff] -3.4028235e+38
    %25 = vst [vmem:[#allocation2 + $0x38] sm:$0xff] -3.4028235e+38
    %26 = vst [vmem:[#allocation2 + $0x40] sm:$0xff] -3.4028235e+38
    %27 = vst [vmem:[#allocation2 + $0x48] sm:$0xff] -3.4028235e+38
    %28 = vst [vmem:[#allocation2 + $0x50] sm:$0xff] -3.4028235e+38
    %29 = vst [vmem:[#allocation2 + $0x58] sm:$0xff] -3.4028235e+38
    %30 = vst [vmem:[#allocation2 + $0x60] sm:$0xff] -3.4028235e+38
    %31 = vst [vmem:[#allocation2 + $0x68] sm:$0xff] -3.4028235e+38
    %32 = vst [vmem:[#allocation2 + $0x70] sm:$0xff] -3.4028235e+38
    %33 = vst [vmem:[#allocation2 + $0x78] sm:$0xff] -3.4028235e+38
  $region17: #{edge_conv.1} parent=0 // pred_fallthru
    _
  %v34 = vld [vmem:[%s1] sm:$0xff]
  %v35 = vld [vmem:[%s1 + $0x8] sm:$0xff]
  %v36 = vld [vmem:[%s1 + $0x10] sm:$0xff]
  %v37 = vld [vmem:[%s1 + $0x18] sm:$0xff]
  %v38 = vld [vmem:[%s1 + $0x20] sm:$0xff]
  %v39 = vld [vmem:[%s1 + $0x28] sm:$0xff]
  %v40 = vld [vmem:[%s1 + $0x30] sm:$0xff]
  %v41 = vld [vmem:[%s1 + $0x38] sm:$0xff]
  %v42 = vld [vmem:[%s1 + $0x40] sm:$0xff]
  %v43 = vld [vmem:[%s1 + $0x48] sm:$0xff]
  %v44 = vld [vmem:[%s1 + $0x50] sm:$0xff]
  %v45 = vld [vmem:[%s1 + $0x58] sm:$0xff]
  %v46 = vld [vmem:[%s1 + $0x60] sm:$0xff]
  %v47 = vld [vmem:[%s1 + $0x68] sm:$0xff]
  %v48 = vld [vmem:[%s1 + $0x70] sm:$0xff]
  %v49 = vld [vmem:[%s1 + $0x78] sm:$0xff]
  %v50 = vmax.f32 %v34, %v38
  %v51 = vmax.f32 %v35, %v39
  %v52 = vmax.f32 %v36, %v40
  %v53 = vmax.f32 %v37, %v41
  %v54 = vmax.f32 %v50, %v42
  %v55 = vmax.f32 %v51, %v43
  %v56 = vmax.f32 %v52, %v44
  %v57 = vmax.f32 %v53, %v45
  %v58 = vmax.f32 %v54, %v46
  %v59 = vmax.f32 %v55, %v47
  %v60 = vmax.f32 %v56, %v48
  %v61 = vmax.f32 %v57, %v49
  %v62 = vmax.f32 %v58, %v59
  %v63 = vmax.f32 %v60, %v61
  %v64 = vmax.f32 %v62, %v63
  %65 = vmax.xlane.f32.xlu0 %v64
  %v66 = vpop.xlane.xlu0 %65
  %v67 = vrot.slane %v66, 4
  %v68 = vmax.f32 %v66, %v67
  %v69 = vrot.slane %v68, 2
  %v70 = vmax.f32 %v68, %v69
  %v71 = vrot.slane %v70, 1
  %v72 = vmax.f32 %v70, %v71
  %s73 = vtos %v72
  %p74 = scmp.ge.f32.partialorder %s73, 0.0
  // Predicated region
  $region18: #{edge_conv.1} parent=0 // pred_check
    %p75 = pneg %p74
  $region19: #{edge_conv.1} parent=0 // pred_check_branch
    %77 = sbr.rel (%p75) target = $region21
  $region20: #{edge_conv.1} parent=0 // pred_region
    %v78 = vld [vmem:[#allocation2] sm:$0xff]
    %v79 = vld [vmem:[#allocation2 + $0x8] sm:$0xff]
    %v80 = vld [vmem:[#allocation2 + $0x10] sm:$0xff]
    %v81 = vld [vmem:[#allocation2 + $0x18] sm:$0xff]
    %v82 = vld [vmem:[#allocation2 + $0x20] sm:$0xff]
    %v83 = vld [vmem:[#allocation2 + $0x28] sm:$0xff]
    %v84 = vld [vmem:[#allocation2 + $0x30] sm:$0xff]
    %v85 = vld [vmem:[#allocation2 + $0x38] sm:$0xff]
    %v86 = vld [vmem:[#allocation2 + $0x40] sm:$0xff]
    %v87 = vld [vmem:[#allocation2 + $0x48] sm:$0xff]
    %v88 = vld [vmem:[#allocation2 + $0x50] sm:$0xff]
    %v89 = vld [vmem:[#allocation2 + $0x58] sm:$0xff]
    %v90 = vld [vmem:[#allocation2 + $0x60] sm:$0xff]
    %v91 = vld [vmem:[#allocation2 + $0x68] sm:$0xff]
    %v92 = vld [vmem:[#allocation2 + $0x70] sm:$0xff]
    %v93 = vld [vmem:[#allocation2 + $0x78] sm:$0xff]
    loop: start=0, step=1, limit=16
    $region22: #{edge_conv.1} parent=20 // loop_pre_header
      _
    $region23: #{edge_conv.1} parent=20 // loop_header
      %s95 = sphi 0, %s99
      %p96 = scmp.ge.s32.totalorder %s95, 16
      %v100 = vphi %v78, %v953
      %v101 = vphi %v79, %v954
      %v102 = vphi %v80, %v955
      %v103 = vphi %v81, %v956
      %v104 = vphi %v82, %v957
      %v105 = vphi %v83, %v958
      %v106 = vphi %v84, %v959
      %v107 = vphi %v85, %v960
      %v108 = vphi %v86, %v961
      %v109 = vphi %v87, %v962
      %v110 = vphi %v88, %v963
      %v111 = vphi %v89, %v964
      %v112 = vphi %v90, %v965
      %v113 = vphi %v91, %v966
      %v114 = vphi %v92, %v967
      %v115 = vphi %v93, %v968
    $region24: #{edge_conv.1} parent=20 // loop_header_branch
      %98 = sbr.rel (%p96) target = $region28
    $region25: #{edge_conv.1} parent=20 // loop_body
      %s116 = smul.u32 %s95, 8
      %s117 = scalar_lea.vmem %s1, %s116
      %v118 = vld [vmem:[%s117] sm:$0xff]
      %s119 = scalar_lea.vmem %s0, %s116
      %v120 = vld [vmem:[%s119] sm:$0xff]
      %121 = vxpose.xlu0.b32.start [1/16] %v118, 128
      %122 = vxpose.xlu0.b32.cont [2/16] 0.0, 128
      %123 = vxpose.xlu0.b32.cont [3/16] 0.0, 128
      %124 = vxpose.xlu0.b32.cont [4/16] 0.0, 128
      %125 = vxpose.xlu0.b32.cont [5/16] 0.0, 128
      %126 = vxpose.xlu0.b32.cont [6/16] 0.0, 128
      %127 = vxpose.xlu0.b32.cont [7/16] 0.0, 128
      %128 = vxpose.xlu0.b32.cont [8/16] 0.0, 128
      %129 = vxpose.xlu0.b32.cont [9/16] 0.0, 128
      %130 = vxpose.xlu0.b32.cont [10/16] 0.0, 128
      %131 = vxpose.xlu0.b32.cont [11/16] 0.0, 128
      %132 = vxpose.xlu0.b32.cont [12/16] 0.0, 128
      %133 = vxpose.xlu0.b32.cont [13/16] 0.0, 128
      %134 = vxpose.xlu0.b32.cont [14/16] 0.0, 128
      %135 = vxpose.xlu0.b32.cont [15/16] 0.0, 128
      %136 = vxpose.xlu0.b32.end [16/16] 0.0, 128
      %v137 = vpop.trf.xlu0
      %v138 = vpop.trf.xlu0
      %v139 = vpop.trf.xlu0
      %v140 = vpop.trf.xlu0
      %v141 = vpop.trf.xlu0
      %v142 = vpop.trf.xlu0
      %v143 = vpop.trf.xlu0
      %v144 = vpop.trf.xlu0
      %v145 = vpop.trf.xlu0
      %v146 = vpop.trf.xlu0
      %v147 = vpop.trf.xlu0
      %v148 = vpop.trf.xlu0
      %v149 = vpop.trf.xlu0
      %v150 = vpop.trf.xlu0
      %v151 = vpop.trf.xlu0
      %v152 = vpop.trf.xlu0
      %154 = vset.pattern.permute.xlu0 0
      %155 = vperm.xlu0 %154, %v137
      %v156 = vpop.permute.xlu0 %155
      %159 = vset.pattern.permute.xlu0 0
      %160 = vperm.xlu0 %159, %v138
      %v161 = vpop.permute.xlu0 %160
      %164 = vset.pattern.permute.xlu0 0
      %165 = vperm.xlu0 %164, %v139
      %v166 = vpop.permute.xlu0 %165
      %169 = vset.pattern.permute.xlu0 0
      %170 = vperm.xlu0 %169, %v140
      %v171 = vpop.permute.xlu0 %170
      %174 = vset.pattern.permute.xlu0 0
      %175 = vperm.xlu0 %174, %v141
      %v176 = vpop.permute.xlu0 %175
      %179 = vset.pattern.permute.xlu0 0
      %180 = vperm.xlu0 %179, %v142
      %v181 = vpop.permute.xlu0 %180
      %184 = vset.pattern.permute.xlu0 0
      %185 = vperm.xlu0 %184, %v143
      %v186 = vpop.permute.xlu0 %185
      %189 = vset.pattern.permute.xlu0 0
      %190 = vperm.xlu0 %189, %v144
      %v191 = vpop.permute.xlu0 %190
      %194 = vset.pattern.permute.xlu0 0
      %195 = vperm.xlu0 %194, %v145
      %v196 = vpop.permute.xlu0 %195
      %199 = vset.pattern.permute.xlu0 0
      %200 = vperm.xlu0 %199, %v146
      %v201 = vpop.permute.xlu0 %200
      %204 = vset.pattern.permute.xlu0 0
      %205 = vperm.xlu0 %204, %v147
      %v206 = vpop.permute.xlu0 %205
      %209 = vset.pattern.permute.xlu0 0
      %210 = vperm.xlu0 %209, %v148
      %v211 = vpop.permute.xlu0 %210
      %214 = vset.pattern.permute.xlu0 0
      %215 = vperm.xlu0 %214, %v149
      %v216 = vpop.permute.xlu0 %215
      %219 = vset.pattern.permute.xlu0 0
      %220 = vperm.xlu0 %219, %v150
      %v221 = vpop.permute.xlu0 %220
      %224 = vset.pattern.permute.xlu0 0
      %225 = vperm.xlu0 %224, %v151
      %v226 = vpop.permute.xlu0 %225
      %229 = vset.pattern.permute.xlu0 0
      %230 = vperm.xlu0 %229, %v152
      %v231 = vpop.permute.xlu0 %230
      %v233 = vlaneseq
      %v234 = vshrl.u32 %v233, 7
      %v235 = vsub.s32 0, %v234
      %v236 = vrot.slane %v120, %v235
      %v237 = vadd.f32 %v156, %v236
      %v238 = vadd.f32 %v161, %v236
      %v239 = vadd.f32 %v166, %v236
      %v240 = vadd.f32 %v171, %v236
      %v241 = vadd.f32 %v176, %v236
      %v242 = vadd.f32 %v181, %v236
      %v243 = vadd.f32 %v186, %v236
      %v244 = vadd.f32 %v191, %v236
      %v245 = vadd.f32 %v196, %v236
      %v246 = vadd.f32 %v201, %v236
      %v247 = vadd.f32 %v206, %v236
      %v248 = vadd.f32 %v211, %v236
      %v249 = vadd.f32 %v216, %v236
      %v250 = vadd.f32 %v221, %v236
      %v251 = vadd.f32 %v226, %v236
      %v252 = vadd.f32 %v231, %v236
      %v253 = vmax.f32 %v100, %v237
      %v254 = vmax.f32 %v101, %v238
      %v255 = vmax.f32 %v102, %v239
      %v256 = vmax.f32 %v103, %v240
      %v257 = vmax.f32 %v104, %v241
      %v258 = vmax.f32 %v105, %v242
      %v259 = vmax.f32 %v106, %v243
      %v260 = vmax.f32 %v107, %v244
      %v261 = vmax.f32 %v108, %v245
      %v262 = vmax.f32 %v109, %v246
      %v263 = vmax.f32 %v110, %v247
      %v264 = vmax.f32 %v111, %v248
      %v265 = vmax.f32 %v112, %v249
      %v266 = vmax.f32 %v113, %v250
      %v267 = vmax.f32 %v114, %v251
      %v268 = vmax.f32 %v115, %v252
      %269 = vset.pattern.permute.xlu0 1
      %270 = vperm.xlu0 %269, %v137
      %v271 = vpop.permute.xlu0 %270
      %273 = vset.pattern.permute.xlu0 1
      %274 = vperm.xlu0 %273, %v138
      %v275 = vpop.permute.xlu0 %274
      %277 = vset.pattern.permute.xlu0 1
      %278 = vperm.xlu0 %277, %v139
      %v279 = vpop.permute.xlu0 %278
      %281 = vset.pattern.permute.xlu0 1
      %282 = vperm.xlu0 %281, %v140
      %v283 = vpop.permute.xlu0 %282
      %285 = vset.pattern.permute.xlu0 1
      %286 = vperm.xlu0 %285, %v141
      %v287 = vpop.permute.xlu0 %286
      %289 = vset.pattern.permute.xlu0 1
      %290 = vperm.xlu0 %289, %v142
      %v291 = vpop.permute.xlu0 %290
      %293 = vset.pattern.permute.xlu0 1
      %294 = vperm.xlu0 %293, %v143
      %v295 = vpop.permute.xlu0 %294
      %297 = vset.pattern.permute.xlu0 1
      %298 = vperm.xlu0 %297, %v144
      %v299 = vpop.permute.xlu0 %298
      %301 = vset.pattern.permute.xlu0 1
      %302 = vperm.xlu0 %301, %v145
      %v303 = vpop.permute.xlu0 %302
      %305 = vset.pattern.permute.xlu0 1
      %306 = vperm.xlu0 %305, %v146
      %v307 = vpop.permute.xlu0 %306
      %309 = vset.pattern.permute.xlu0 1
      %310 = vperm.xlu0 %309, %v147
      %v311 = vpop.permute.xlu0 %310
      %313 = vset.pattern.permute.xlu0 1
      %314 = vperm.xlu0 %313, %v148
      %v315 = vpop.permute.xlu0 %314
      %317 = vset.pattern.permute.xlu0 1
      %318 = vperm.xlu0 %317, %v149
      %v319 = vpop.permute.xlu0 %318
      %321 = vset.pattern.permute.xlu0 1
      %322 = vperm.xlu0 %321, %v150
      %v323 = vpop.permute.xlu0 %322
      %325 = vset.pattern.permute.xlu0 1
      %326 = vperm.xlu0 %325, %v151
      %v327 = vpop.permute.xlu0 %326
      %329 = vset.pattern.permute.xlu0 1
      %330 = vperm.xlu0 %329, %v152
      %v331 = vpop.permute.xlu0 %330
      %v333 = vlaneseq
      %v334 = vshrl.u32 %v333, 7
      %v335 = vsub.s32 1, %v334
      %v336 = vrot.slane %v120, %v335
      %v337 = vadd.f32 %v271, %v336
      %v338 = vadd.f32 %v275, %v336
      %v339 = vadd.f32 %v279, %v336
      %v340 = vadd.f32 %v283, %v336
      %v341 = vadd.f32 %v287, %v336
      %v342 = vadd.f32 %v291, %v336
      %v343 = vadd.f32 %v295, %v336
      %v344 = vadd.f32 %v299, %v336
      %v345 = vadd.f32 %v303, %v336
      %v346 = vadd.f32 %v307, %v336
      %v347 = vadd.f32 %v311, %v336
      %v348 = vadd.f32 %v315, %v336
      %v349 = vadd.f32 %v319, %v336
      %v350 = vadd.f32 %v323, %v336
      %v351 = vadd.f32 %v327, %v336
      %v352 = vadd.f32 %v331, %v336
      %v353 = vmax.f32 %v253, %v337
      %v354 = vmax.f32 %v254, %v338
      %v355 = vmax.f32 %v255, %v339
      %v356 = vmax.f32 %v256, %v340
      %v357 = vmax.f32 %v257, %v341
      %v358 = vmax.f32 %v258, %v342
      %v359 = vmax.f32 %v259, %v343
      %v360 = vmax.f32 %v260, %v344
      %v361 = vmax.f32 %v261, %v345
      %v362 = vmax.f32 %v262, %v346
      %v363 = vmax.f32 %v263, %v347
      %v364 = vmax.f32 %v264, %v348
      %v365 = vmax.f32 %v265, %v349
      %v366 = vmax.f32 %v266, %v350
      %v367 = vmax.f32 %v267, %v351
      %v368 = vmax.f32 %v268, %v352
      %369 = vset.pattern.permute.xlu0 2
      %370 = vperm.xlu0 %369, %v137
      %v371 = vpop.permute.xlu0 %370
      %373 = vset.pattern.permute.xlu0 2
      %374 = vperm.xlu0 %373, %v138
      %v375 = vpop.permute.xlu0 %374
      %377 = vset.pattern.permute.xlu0 2
      %378 = vperm.xlu0 %377, %v139
      %v379 = vpop.permute.xlu0 %378
      %381 = vset.pattern.permute.xlu0 2
      %382 = vperm.xlu0 %381, %v140
      %v383 = vpop.permute.xlu0 %382
      %385 = vset.pattern.permute.xlu0 2
      %386 = vperm.xlu0 %385, %v141
      %v387 = vpop.permute.xlu0 %386
      %389 = vset.pattern.permute.xlu0 2
      %390 = vperm.xlu0 %389, %v142
      %v391 = vpop.permute.xlu0 %390
      %393 = vset.pattern.permute.xlu0 2
      %394 = vperm.xlu0 %393, %v143
      %v395 = vpop.permute.xlu0 %394
      %397 = vset.pattern.permute.xlu0 2
      %398 = vperm.xlu0 %397, %v144
      %v399 = vpop.permute.xlu0 %398
      %401 = vset.pattern.permute.xlu0 2
      %402 = vperm.xlu0 %401, %v145
      %v403 = vpop.permute.xlu0 %402
      %405 = vset.pattern.permute.xlu0 2
      %406 = vperm.xlu0 %405, %v146
      %v407 = vpop.permute.xlu0 %406
      %409 = vset.pattern.permute.xlu0 2
      %410 = vperm.xlu0 %409, %v147
      %v411 = vpop.permute.xlu0 %410
      %413 = vset.pattern.permute.xlu0 2
      %414 = vperm.xlu0 %413, %v148
      %v415 = vpop.permute.xlu0 %414
      %417 = vset.pattern.permute.xlu0 2
      %418 = vperm.xlu0 %417, %v149
      %v419 = vpop.permute.xlu0 %418
      %421 = vset.pattern.permute.xlu0 2
      %422 = vperm.xlu0 %421, %v150
      %v423 = vpop.permute.xlu0 %422
      %425 = vset.pattern.permute.xlu0 2
      %426 = vperm.xlu0 %425, %v151
      %v427 = vpop.permute.xlu0 %426
      %429 = vset.pattern.permute.xlu0 2
      %430 = vperm.xlu0 %429, %v152
      %v431 = vpop.permute.xlu0 %430
      %v433 = vlaneseq
      %v434 = vshrl.u32 %v433, 7
      %v435 = vsub.s32 2, %v434
      %v436 = vrot.slane %v120, %v435
      %v437 = vadd.f32 %v371, %v436
      %v438 = vadd.f32 %v375, %v436
      %v439 = vadd.f32 %v379, %v436
      %v440 = vadd.f32 %v383, %v436
      %v441 = vadd.f32 %v387, %v436
      %v442 = vadd.f32 %v391, %v436
      %v443 = vadd.f32 %v395, %v436
      %v444 = vadd.f32 %v399, %v436
      %v445 = vadd.f32 %v403, %v436
      %v446 = vadd.f32 %v407, %v436
      %v447 = vadd.f32 %v411, %v436
      %v448 = vadd.f32 %v415, %v436
      %v449 = vadd.f32 %v419, %v436
      %v450 = vadd.f32 %v423, %v436
      %v451 = vadd.f32 %v427, %v436
      %v452 = vadd.f32 %v431, %v436
      %v453 = vmax.f32 %v353, %v437
      %v454 = vmax.f32 %v354, %v438
      %v455 = vmax.f32 %v355, %v439
      %v456 = vmax.f32 %v356, %v440
      %v457 = vmax.f32 %v357, %v441
      %v458 = vmax.f32 %v358, %v442
      %v459 = vmax.f32 %v359, %v443
      %v460 = vmax.f32 %v360, %v444
      %v461 = vmax.f32 %v361, %v445
      %v462 = vmax.f32 %v362, %v446
      %v463 = vmax.f32 %v363, %v447
      %v464 = vmax.f32 %v364, %v448
      %v465 = vmax.f32 %v365, %v449
      %v466 = vmax.f32 %v366, %v450
      %v467 = vmax.f32 %v367, %v451
      %v468 = vmax.f32 %v368, %v452
      %469 = vset.pattern.permute.xlu0 3
      %470 = vperm.xlu0 %469, %v137
      %v471 = vpop.permute.xlu0 %470
      %473 = vset.pattern.permute.xlu0 3
      %474 = vperm.xlu0 %473, %v138
      %v475 = vpop.permute.xlu0 %474
      %477 = vset.pattern.permute.xlu0 3
      %478 = vperm.xlu0 %477, %v139
      %v479 = vpop.permute.xlu0 %478
      %481 = vset.pattern.permute.xlu0 3
      %482 = vperm.xlu0 %481, %v140
      %v483 = vpop.permute.xlu0 %482
      %485 = vset.pattern.permute.xlu0 3
      %486 = vperm.xlu0 %485, %v141
      %v487 = vpop.permute.xlu0 %486
      %489 = vset.pattern.permute.xlu0 3
      %490 = vperm.xlu0 %489, %v142
      %v491 = vpop.permute.xlu0 %490
      %493 = vset.pattern.permute.xlu0 3
      %494 = vperm.xlu0 %493, %v143
      %v495 = vpop.permute.xlu0 %494
      %497 = vset.pattern.permute.xlu0 3
      %498 = vperm.xlu0 %497, %v144
      %v499 = vpop.permute.xlu0 %498
      %501 = vset.pattern.permute.xlu0 3
      %502 = vperm.xlu0 %501, %v145
      %v503 = vpop.permute.xlu0 %502
      %505 = vset.pattern.permute.xlu0 3
      %506 = vperm.xlu0 %505, %v146
      %v507 = vpop.permute.xlu0 %506
      %509 = vset.pattern.permute.xlu0 3
      %510 = vperm.xlu0 %509, %v147
      %v511 = vpop.permute.xlu0 %510
      %513 = vset.pattern.permute.xlu0 3
      %514 = vperm.xlu0 %513, %v148
      %v515 = vpop.permute.xlu0 %514
      %517 = vset.pattern.permute.xlu0 3
      %518 = vperm.xlu0 %517, %v149
      %v519 = vpop.permute.xlu0 %518
      %521 = vset.pattern.permute.xlu0 3
      %522 = vperm.xlu0 %521, %v150
      %v523 = vpop.permute.xlu0 %522
      %525 = vset.pattern.permute.xlu0 3
      %526 = vperm.xlu0 %525, %v151
      %v527 = vpop.permute.xlu0 %526
      %529 = vset.pattern.permute.xlu0 3
      %530 = vperm.xlu0 %529, %v152
      %v531 = vpop.permute.xlu0 %530
      %v533 = vlaneseq
      %v534 = vshrl.u32 %v533, 7
      %v535 = vsub.s32 3, %v534
      %v536 = vrot.slane %v120, %v535
      %v537 = vadd.f32 %v471, %v536
      %v538 = vadd.f32 %v475, %v536
      %v539 = vadd.f32 %v479, %v536
      %v540 = vadd.f32 %v483, %v536
      %v541 = vadd.f32 %v487, %v536
      %v542 = vadd.f32 %v491, %v536
      %v543 = vadd.f32 %v495, %v536
      %v544 = vadd.f32 %v499, %v536
      %v545 = vadd.f32 %v503, %v536
      %v546 = vadd.f32 %v507, %v536
      %v547 = vadd.f32 %v511, %v536
      %v548 = vadd.f32 %v515, %v536
      %v549 = vadd.f32 %v519, %v536
      %v550 = vadd.f32 %v523, %v536
      %v551 = vadd.f32 %v527, %v536
      %v552 = vadd.f32 %v531, %v536
      %v553 = vmax.f32 %v453, %v537
      %v554 = vmax.f32 %v454, %v538
      %v555 = vmax.f32 %v455, %v539
      %v556 = vmax.f32 %v456, %v540
      %v557 = vmax.f32 %v457, %v541
      %v558 = vmax.f32 %v458, %v542
      %v559 = vmax.f32 %v459, %v543
      %v560 = vmax.f32 %v460, %v544
      %v561 = vmax.f32 %v461, %v545
      %v562 = vmax.f32 %v462, %v546
      %v563 = vmax.f32 %v463, %v547
      %v564 = vmax.f32 %v464, %v548
      %v565 = vmax.f32 %v465, %v549
      %v566 = vmax.f32 %v466, %v550
      %v567 = vmax.f32 %v467, %v551
      %v568 = vmax.f32 %v468, %v552
      %569 = vset.pattern.permute.xlu0 4
      %570 = vperm.xlu0 %569, %v137
      %v571 = vpop.permute.xlu0 %570
      %573 = vset.pattern.permute.xlu0 4
      %574 = vperm.xlu0 %573, %v138
      %v575 = vpop.permute.xlu0 %574
      %577 = vset.pattern.permute.xlu0 4
      %578 = vperm.xlu0 %577, %v139
      %v579 = vpop.permute.xlu0 %578
      %581 = vset.pattern.permute.xlu0 4
      %582 = vperm.xlu0 %581, %v140
      %v583 = vpop.permute.xlu0 %582
      %585 = vset.pattern.permute.xlu0 4
      %586 = vperm.xlu0 %585, %v141
      %v587 = vpop.permute.xlu0 %586
      %589 = vset.pattern.permute.xlu0 4
      %590 = vperm.xlu0 %589, %v142
      %v591 = vpop.permute.xlu0 %590
      %593 = vset.pattern.permute.xlu0 4
      %594 = vperm.xlu0 %593, %v143
      %v595 = vpop.permute.xlu0 %594
      %597 = vset.pattern.permute.xlu0 4
      %598 = vperm.xlu0 %597, %v144
      %v599 = vpop.permute.xlu0 %598
      %601 = vset.pattern.permute.xlu0 4
      %602 = vperm.xlu0 %601, %v145
      %v603 = vpop.permute.xlu0 %602
      %605 = vset.pattern.permute.xlu0 4
      %606 = vperm.xlu0 %605, %v146
      %v607 = vpop.permute.xlu0 %606
      %609 = vset.pattern.permute.xlu0 4
      %610 = vperm.xlu0 %609, %v147
      %v611 = vpop.permute.xlu0 %610
      %613 = vset.pattern.permute.xlu0 4
      %614 = vperm.xlu0 %613, %v148
      %v615 = vpop.permute.xlu0 %614
      %617 = vset.pattern.permute.xlu0 4
      %618 = vperm.xlu0 %617, %v149
      %v619 = vpop.permute.xlu0 %618
      %621 = vset.pattern.permute.xlu0 4
      %622 = vperm.xlu0 %621, %v150
      %v623 = vpop.permute.xlu0 %622
      %625 = vset.pattern.permute.xlu0 4
      %626 = vperm.xlu0 %625, %v151
      %v627 = vpop.permute.xlu0 %626
      %629 = vset.pattern.permute.xlu0 4
      %630 = vperm.xlu0 %629, %v152
      %v631 = vpop.permute.xlu0 %630
      %v633 = vlaneseq
      %v634 = vshrl.u32 %v633, 7
      %v635 = vsub.s32 4, %v634
      %v636 = vrot.slane %v120, %v635
      %v637 = vadd.f32 %v571, %v636
      %v638 = vadd.f32 %v575, %v636
      %v639 = vadd.f32 %v579, %v636
      %v640 = vadd.f32 %v583, %v636
      %v641 = vadd.f32 %v587, %v636
      %v642 = vadd.f32 %v591, %v636
      %v643 = vadd.f32 %v595, %v636
      %v644 = vadd.f32 %v599, %v636
      %v645 = vadd.f32 %v603, %v636
      %v646 = vadd.f32 %v607, %v636
      %v647 = vadd.f32 %v611, %v636
      %v648 = vadd.f32 %v615, %v636
      %v649 = vadd.f32 %v619, %v636
      %v650 = vadd.f32 %v623, %v636
      %v651 = vadd.f32 %v627, %v636
      %v652 = vadd.f32 %v631, %v636
      %v653 = vmax.f32 %v553, %v637
      %v654 = vmax.f32 %v554, %v638
      %v655 = vmax.f32 %v555, %v639
      %v656 = vmax.f32 %v556, %v640
      %v657 = vmax.f32 %v557, %v641
      %v658 = vmax.f32 %v558, %v642
      %v659 = vmax.f32 %v559, %v643
      %v660 = vmax.f32 %v560, %v644
      %v661 = vmax.f32 %v561, %v645
      %v662 = vmax.f32 %v562, %v646
      %v663 = vmax.f32 %v563, %v647
      %v664 = vmax.f32 %v564, %v648
      %v665 = vmax.f32 %v565, %v649
      %v666 = vmax.f32 %v566, %v650
      %v667 = vmax.f32 %v567, %v651
      %v668 = vmax.f32 %v568, %v652
      %669 = vset.pattern.permute.xlu0 5
      %670 = vperm.xlu0 %669, %v137
      %v671 = vpop.permute.xlu0 %670
      %673 = vset.pattern.permute.xlu0 5
      %674 = vperm.xlu0 %673, %v138
      %v675 = vpop.permute.xlu0 %674
      %677 = vset.pattern.permute.xlu0 5
      %678 = vperm.xlu0 %677, %v139
      %v679 = vpop.permute.xlu0 %678
      %681 = vset.pattern.permute.xlu0 5
      %682 = vperm.xlu0 %681, %v140
      %v683 = vpop.permute.xlu0 %682
      %685 = vset.pattern.permute.xlu0 5
      %686 = vperm.xlu0 %685, %v141
      %v687 = vpop.permute.xlu0 %686
      %689 = vset.pattern.permute.xlu0 5
      %690 = vperm.xlu0 %689, %v142
      %v691 = vpop.permute.xlu0 %690
      %693 = vset.pattern.permute.xlu0 5
      %694 = vperm.xlu0 %693, %v143
      %v695 = vpop.permute.xlu0 %694
      %697 = vset.pattern.permute.xlu0 5
      %698 = vperm.xlu0 %697, %v144
      %v699 = vpop.permute.xlu0 %698
      %701 = vset.pattern.permute.xlu0 5
      %702 = vperm.xlu0 %701, %v145
      %v703 = vpop.permute.xlu0 %702
      %705 = vset.pattern.permute.xlu0 5
      %706 = vperm.xlu0 %705, %v146
      %v707 = vpop.permute.xlu0 %706
      %709 = vset.pattern.permute.xlu0 5
      %710 = vperm.xlu0 %709, %v147
      %v711 = vpop.permute.xlu0 %710
      %713 = vset.pattern.permute.xlu0 5
      %714 = vperm.xlu0 %713, %v148
      %v715 = vpop.permute.xlu0 %714
      %717 = vset.pattern.permute.xlu0 5
      %718 = vperm.xlu0 %717, %v149
      %v719 = vpop.permute.xlu0 %718
      %721 = vset.pattern.permute.xlu0 5
      %722 = vperm.xlu0 %721, %v150
      %v723 = vpop.permute.xlu0 %722
      %725 = vset.pattern.permute.xlu0 5
      %726 = vperm.xlu0 %725, %v151
      %v727 = vpop.permute.xlu0 %726
      %729 = vset.pattern.permute.xlu0 5
      %730 = vperm.xlu0 %729, %v152
      %v731 = vpop.permute.xlu0 %730
      %v733 = vlaneseq
      %v734 = vshrl.u32 %v733, 7
      %v735 = vsub.s32 5, %v734
      %v736 = vrot.slane %v120, %v735
      %v737 = vadd.f32 %v671, %v736
      %v738 = vadd.f32 %v675, %v736
      %v739 = vadd.f32 %v679, %v736
      %v740 = vadd.f32 %v683, %v736
      %v741 = vadd.f32 %v687, %v736
      %v742 = vadd.f32 %v691, %v736
      %v743 = vadd.f32 %v695, %v736
      %v744 = vadd.f32 %v699, %v736
      %v745 = vadd.f32 %v703, %v736
      %v746 = vadd.f32 %v707, %v736
      %v747 = vadd.f32 %v711, %v736
      %v748 = vadd.f32 %v715, %v736
      %v749 = vadd.f32 %v719, %v736
      %v750 = vadd.f32 %v723, %v736
      %v751 = vadd.f32 %v727, %v736
      %v752 = vadd.f32 %v731, %v736
      %v753 = vmax.f32 %v653, %v737
      %v754 = vmax.f32 %v654, %v738
      %v755 = vmax.f32 %v655, %v739
      %v756 = vmax.f32 %v656, %v740
      %v757 = vmax.f32 %v657, %v741
      %v758 = vmax.f32 %v658, %v742
      %v759 = vmax.f32 %v659, %v743
      %v760 = vmax.f32 %v660, %v744
      %v761 = vmax.f32 %v661, %v745
      %v762 = vmax.f32 %v662, %v746
      %v763 = vmax.f32 %v663, %v747
      %v764 = vmax.f32 %v664, %v748
      %v765 = vmax.f32 %v665, %v749
      %v766 = vmax.f32 %v666, %v750
      %v767 = vmax.f32 %v667, %v751
      %v768 = vmax.f32 %v668, %v752
      %769 = vset.pattern.permute.xlu0 6
      %770 = vperm.xlu0 %769, %v137
      %v771 = vpop.permute.xlu0 %770
      %773 = vset.pattern.permute.xlu0 6
      %774 = vperm.xlu0 %773, %v138
      %v775 = vpop.permute.xlu0 %774
      %777 = vset.pattern.permute.xlu0 6
      %778 = vperm.xlu0 %777, %v139
      %v779 = vpop.permute.xlu0 %778
      %781 = vset.pattern.permute.xlu0 6
      %782 = vperm.xlu0 %781, %v140
      %v783 = vpop.permute.xlu0 %782
      %785 = vset.pattern.permute.xlu0 6
      %786 = vperm.xlu0 %785, %v141
      %v787 = vpop.permute.xlu0 %786
      %789 = vset.pattern.permute.xlu0 6
      %790 = vperm.xlu0 %789, %v142
      %v791 = vpop.permute.xlu0 %790
      %793 = vset.pattern.permute.xlu0 6
      %794 = vperm.xlu0 %793, %v143
      %v795 = vpop.permute.xlu0 %794
      %797 = vset.pattern.permute.xlu0 6
      %798 = vperm.xlu0 %797, %v144
      %v799 = vpop.permute.xlu0 %798
      %801 = vset.pattern.permute.xlu0 6
      %802 = vperm.xlu0 %801, %v145
      %v803 = vpop.permute.xlu0 %802
      %805 = vset.pattern.permute.xlu0 6
      %806 = vperm.xlu0 %805, %v146
      %v807 = vpop.permute.xlu0 %806
      %809 = vset.pattern.permute.xlu0 6
      %810 = vperm.xlu0 %809, %v147
      %v811 = vpop.permute.xlu0 %810
      %813 = vset.pattern.permute.xlu0 6
      %814 = vperm.xlu0 %813, %v148
      %v815 = vpop.permute.xlu0 %814
      %817 = vset.pattern.permute.xlu0 6
      %818 = vperm.xlu0 %817, %v149
      %v819 = vpop.permute.xlu0 %818
      %821 = vset.pattern.permute.xlu0 6
      %822 = vperm.xlu0 %821, %v150
      %v823 = vpop.permute.xlu0 %822
      %825 = vset.pattern.permute.xlu0 6
      %826 = vperm.xlu0 %825, %v151
      %v827 = vpop.permute.xlu0 %826
      %829 = vset.pattern.permute.xlu0 6
      %830 = vperm.xlu0 %829, %v152
      %v831 = vpop.permute.xlu0 %830
      %v833 = vlaneseq
      %v834 = vshrl.u32 %v833, 7
      %v835 = vsub.s32 6, %v834
      %v836 = vrot.slane %v120, %v835
      %v837 = vadd.f32 %v771, %v836
      %v838 = vadd.f32 %v775, %v836
      %v839 = vadd.f32 %v779, %v836
      %v840 = vadd.f32 %v783, %v836
      %v841 = vadd.f32 %v787, %v836
      %v842 = vadd.f32 %v791, %v836
      %v843 = vadd.f32 %v795, %v836
      %v844 = vadd.f32 %v799, %v836
      %v845 = vadd.f32 %v803, %v836
      %v846 = vadd.f32 %v807, %v836
      %v847 = vadd.f32 %v811, %v836
      %v848 = vadd.f32 %v815, %v836
      %v849 = vadd.f32 %v819, %v836
      %v850 = vadd.f32 %v823, %v836
      %v851 = vadd.f32 %v827, %v836
      %v852 = vadd.f32 %v831, %v836
      %v853 = vmax.f32 %v753, %v837
      %v854 = vmax.f32 %v754, %v838
      %v855 = vmax.f32 %v755, %v839
      %v856 = vmax.f32 %v756, %v840
      %v857 = vmax.f32 %v757, %v841
      %v858 = vmax.f32 %v758, %v842
      %v859 = vmax.f32 %v759, %v843
      %v860 = vmax.f32 %v760, %v844
      %v861 = vmax.f32 %v761, %v845
      %v862 = vmax.f32 %v762, %v846
      %v863 = vmax.f32 %v763, %v847
      %v864 = vmax.f32 %v764, %v848
      %v865 = vmax.f32 %v765, %v849
      %v866 = vmax.f32 %v766, %v850
      %v867 = vmax.f32 %v767, %v851
      %v868 = vmax.f32 %v768, %v852
      %869 = vset.pattern.permute.xlu0 7
      %870 = vperm.xlu0 %869, %v137
      %v871 = vpop.permute.xlu0 %870
      %873 = vset.pattern.permute.xlu0 7
      %874 = vperm.xlu0 %873, %v138
      %v875 = vpop.permute.xlu0 %874
      %877 = vset.pattern.permute.xlu0 7
      %878 = vperm.xlu0 %877, %v139
      %v879 = vpop.permute.xlu0 %878
      %881 = vset.pattern.permute.xlu0 7
      %882 = vperm.xlu0 %881, %v140
      %v883 = vpop.permute.xlu0 %882
      %885 = vset.pattern.permute.xlu0 7
      %886 = vperm.xlu0 %885, %v141
      %v887 = vpop.permute.xlu0 %886
      %889 = vset.pattern.permute.xlu0 7
      %890 = vperm.xlu0 %889, %v142
      %v891 = vpop.permute.xlu0 %890
      %893 = vset.pattern.permute.xlu0 7
      %894 = vperm.xlu0 %893, %v143
      %v895 = vpop.permute.xlu0 %894
      %897 = vset.pattern.permute.xlu0 7
      %898 = vperm.xlu0 %897, %v144
      %v899 = vpop.permute.xlu0 %898
      %901 = vset.pattern.permute.xlu0 7
      %902 = vperm.xlu0 %901, %v145
      %v903 = vpop.permute.xlu0 %902
      %905 = vset.pattern.permute.xlu0 7
      %906 = vperm.xlu0 %905, %v146
      %v907 = vpop.permute.xlu0 %906
      %909 = vset.pattern.permute.xlu0 7
      %910 = vperm.xlu0 %909, %v147
      %v911 = vpop.permute.xlu0 %910
      %913 = vset.pattern.permute.xlu0 7
      %914 = vperm.xlu0 %913, %v148
      %v915 = vpop.permute.xlu0 %914
      %917 = vset.pattern.permute.xlu0 7
      %918 = vperm.xlu0 %917, %v149
      %v919 = vpop.permute.xlu0 %918
      %921 = vset.pattern.permute.xlu0 7
      %922 = vperm.xlu0 %921, %v150
      %v923 = vpop.permute.xlu0 %922
      %925 = vset.pattern.permute.xlu0 7
      %926 = vperm.xlu0 %925, %v151
      %v927 = vpop.permute.xlu0 %926
      %929 = vset.pattern.permute.xlu0 7
      %930 = vperm.xlu0 %929, %v152
      %v931 = vpop.permute.xlu0 %930
      %v933 = vlaneseq
      %v934 = vshrl.u32 %v933, 7
      %v935 = vsub.s32 7, %v934
      %v936 = vrot.slane %v120, %v935
      %v937 = vadd.f32 %v871, %v936
      %v938 = vadd.f32 %v875, %v936
      %v939 = vadd.f32 %v879, %v936
      %v940 = vadd.f32 %v883, %v936
      %v941 = vadd.f32 %v887, %v936
      %v942 = vadd.f32 %v891, %v936
      %v943 = vadd.f32 %v895, %v936
      %v944 = vadd.f32 %v899, %v936
      %v945 = vadd.f32 %v903, %v936
      %v946 = vadd.f32 %v907, %v936
      %v947 = vadd.f32 %v911, %v936
      %v948 = vadd.f32 %v915, %v936
      %v949 = vadd.f32 %v919, %v936
      %v950 = vadd.f32 %v923, %v936
      %v951 = vadd.f32 %v927, %v936
      %v952 = vadd.f32 %v931, %v936
      %v953 = vmax.f32 %v853, %v937
      %v954 = vmax.f32 %v854, %v938
      %v955 = vmax.f32 %v855, %v939
      %v956 = vmax.f32 %v856, %v940
      %v957 = vmax.f32 %v857, %v941
      %v958 = vmax.f32 %v858, %v942
      %v959 = vmax.f32 %v859, %v943
      %v960 = vmax.f32 %v860, %v944
      %v961 = vmax.f32 %v861, %v945
      %v962 = vmax.f32 %v862, %v946
      %v963 = vmax.f32 %v863, %v947
      %v964 = vmax.f32 %v864, %v948
      %v965 = vmax.f32 %v865, %v949
      %v966 = vmax.f32 %v866, %v950
      %v967 = vmax.f32 %v867, %v951
      %v968 = vmax.f32 %v868, %v952
    $region26: #{edge_conv.1} parent=20 // loop_footer
      %s99 = sadd.s32 1, %s95
    $region27: #{edge_conv.1} parent=20 // loop_footer_branch
      %94 = sbr.rel target = $region23
    $region28: #{edge_conv.1} parent=20 // loop_exit
      _
    %969 = vst [vmem:[#allocation2] sm:$0xff] %v100
    %970 = vst [vmem:[#allocation2 + $0x8] sm:$0xff] %v101
    %971 = vst [vmem:[#allocation2 + $0x10] sm:$0xff] %v102
    %972 = vst [vmem:[#allocation2 + $0x18] sm:$0xff] %v103
    %973 = vst [vmem:[#allocation2 + $0x20] sm:$0xff] %v104
    %974 = vst [vmem:[#allocation2 + $0x28] sm:$0xff] %v105
    %975 = vst [vmem:[#allocation2 + $0x30] sm:$0xff] %v106
    %976 = vst [vmem:[#allocation2 + $0x38] sm:$0xff] %v107
    %977 = vst [vmem:[#allocation2 + $0x40] sm:$0xff] %v108
    %978 = vst [vmem:[#allocation2 + $0x48] sm:$0xff] %v109
    %979 = vst [vmem:[#allocation2 + $0x50] sm:$0xff] %v110
    %980 = vst [vmem:[#allocation2 + $0x58] sm:$0xff] %v111
    %981 = vst [vmem:[#allocation2 + $0x60] sm:$0xff] %v112
    %982 = vst [vmem:[#allocation2 + $0x68] sm:$0xff] %v113
    %983 = vst [vmem:[#allocation2 + $0x70] sm:$0xff] %v114
    %984 = vst [vmem:[#allocation2 + $0x78] sm:$0xff] %v115
  $region21: #{edge_conv.1} parent=0 // pred_fallthru
    _
  // Predicated region
  $region29: #{edge_conv.1} parent=0 // pred_check
    %p985 = pneg %p14
  $region30: #{edge_conv.1} parent=0 // pred_check_branch
    %987 = sbr.rel (%p985) target = $region32
  $region31: #{edge_conv.1} parent=0 // pred_region
    %v988 = vld [vmem:[#allocation2] sm:$0xff]
    %v989 = vld [vmem:[#allocation2 + $0x8] sm:$0xff]
    %v990 = vld [vmem:[#allocation2 + $0x10] sm:$0xff]
    %v991 = vld [vmem:[#allocation2 + $0x18] sm:$0xff]
    %v992 = vld [vmem:[#allocation2 + $0x20] sm:$0xff]
    %v993 = vld [vmem:[#allocation2 + $0x28] sm:$0xff]
    %v994 = vld [vmem:[#allocation2 + $0x30] sm:$0xff]
    %v995 = vld [vmem:[#allocation2 + $0x38] sm:$0xff]
    %v996 = vld [vmem:[#allocation2 + $0x40] sm:$0xff]
    %v997 = vld [vmem:[#allocation2 + $0x48] sm:$0xff]
    %v998 = vld [vmem:[#allocation2 + $0x50] sm:$0xff]
    %v999 = vld [vmem:[#allocation2 + $0x58] sm:$0xff]
    %v1000 = vld [vmem:[#allocation2 + $0x60] sm:$0xff]
    %v1001 = vld [vmem:[#allocation2 + $0x68] sm:$0xff]
    %v1002 = vld [vmem:[#allocation2 + $0x70] sm:$0xff]
    %v1003 = vld [vmem:[#allocation2 + $0x78] sm:$0xff]
    %v1004 = vld [vmem:[%s2] sm:$0xff]
    %v1005 = vld [vmem:[%s2 + $0x8] sm:$0xff]
    %v1006 = vld [vmem:[%s2 + $0x10] sm:$0xff]
    %v1007 = vld [vmem:[%s2 + $0x18] sm:$0xff]
    %v1008 = vld [vmem:[%s2 + $0x20] sm:$0xff]
    %v1009 = vld [vmem:[%s2 + $0x28] sm:$0xff]
    %v1010 = vld [vmem:[%s2 + $0x30] sm:$0xff]
    %v1011 = vld [vmem:[%s2 + $0x38] sm:$0xff]
    %v1012 = vld [vmem:[%s2 + $0x40] sm:$0xff]
    %v1013 = vld [vmem:[%s2 + $0x48] sm:$0xff]
    %v1014 = vld [vmem:[%s2 + $0x50] sm:$0xff]
    %v1015 = vld [vmem:[%s2 + $0x58] sm:$0xff]
    %v1016 = vld [vmem:[%s2 + $0x60] sm:$0xff]
    %v1017 = vld [vmem:[%s2 + $0x68] sm:$0xff]
    %v1018 = vld [vmem:[%s2 + $0x70] sm:$0xff]
    %v1019 = vld [vmem:[%s2 + $0x78] sm:$0xff]
    %v1020 = vadd.f32 %v988, %v1004
    %v1021 = vadd.f32 %v989, %v1005
    %v1022 = vadd.f32 %v990, %v1006
    %v1023 = vadd.f32 %v991, %v1007
    %v1024 = vadd.f32 %v992, %v1008
    %v1025 = vadd.f32 %v993, %v1009
    %v1026 = vadd.f32 %v994, %v1010
    %v1027 = vadd.f32 %v995, %v1011
    %v1028 = vadd.f32 %v996, %v1012
    %v1029 = vadd.f32 %v997, %v1013
    %v1030 = vadd.f32 %v998, %v1014
    %v1031 = vadd.f32 %v999, %v1015
    %v1032 = vadd.f32 %v1000, %v1016
    %v1033 = vadd.f32 %v1001, %v1017
    %v1034 = vadd.f32 %v1002, %v1018
    %v1035 = vadd.f32 %v1003, %v1019
    %1036 = vst [vmem:[%s3] sm:$0xff] %v1020
    %1037 = vst [vmem:[%s3 + $0x8] sm:$0xff] %v1021
    %1038 = vst [vmem:[%s3 + $0x10] sm:$0xff] %v1022
    %1039 = vst [vmem:[%s3 + $0x18] sm:$0xff] %v1023
    %1040 = vst [vmem:[%s3 + $0x20] sm:$0xff] %v1024
    %1041 = vst [vmem:[%s3 + $0x28] sm:$0xff] %v1025
    %1042 = vst [vmem:[%s3 + $0x30] sm:$0xff] %v1026
    %1043 = vst [vmem:[%s3 + $0x38] sm:$0xff] %v1027
    %1044 = vst [vmem:[%s3 + $0x40] sm:$0xff] %v1028
    %1045 = vst [vmem:[%s3 + $0x48] sm:$0xff] %v1029
    %1046 = vst [vmem:[%s3 + $0x50] sm:$0xff] %v1030
    %1047 = vst [vmem:[%s3 + $0x58] sm:$0xff] %v1031
    %1048 = vst [vmem:[%s3 + $0x60] sm:$0xff] %v1032
    %1049 = vst [vmem:[%s3 + $0x68] sm:$0xff] %v1033
    %1050 = vst [vmem:[%s3 + $0x70] sm:$0xff] %v1034
    %1051 = vst [vmem:[%s3 + $0x78] sm:$0xff] %v1035
  $region32: #{edge_conv.1} parent=0 // pred_fallthru
    _
  // Predicated region
  $region33: #{edge_conv.1} parent=0 // pred_check
    _
  $region34: #{edge_conv.1} parent=0 // pred_check_branch
    %1053 = sbr.rel (0) target = $region36
  $region35: #{edge_conv.1} parent=0 // pred_region
    _
  $region36: #{edge_conv.1} parent=0 // pred_fallthru
    _
  // Predicated region
  $region37: #{edge_conv.1} parent=0 // pred_check
    _
  $region38: #{edge_conv.1} parent=0 // pred_check_branch
    %1055 = sbr.rel (0) target = $region40
  $region39: #{edge_conv.1} parent=0 // pred_region
    _
  $region40: #{edge_conv.1} parent=0 // pred_fallthru
    _

</llo_original>
